<compile_context>
chip_gen: v7x
topology: tpu7x:2x2x1
jax: 0.10.0
libtpu: 0.0.40
codegen_flags: <defaults>
</compile_context>

<pallas_src>
import functools

import jax
import jax.numpy as jnp
from jax import lax
from jax.experimental import pallas as pl
from jax.experimental.pallas import tpu as pltpu

_LANE = 128


def _dice_sums_kernel(logits_ref, masks_ref, out_ref, *, hw, tiles_per_chunk,
                      needs_mask):
    """Per-tile partial sums for the dice loss.

    logits_ref: (1, C, S, 128)    float (any float dtype; upcast to f32 here)
    masks_ref:  (1, 1, S, 128)    int32
    out_ref:    (1, 1, 3, C, 128) f32 accumulator, resident across tile axis
    """
    chunk = pl.program_id(1)
    t = pl.program_id(2)

    x = logits_ref[0].astype(jnp.float32)            # (C, S, 128)
    m = masks_ref[0, 0]                              # (S, 128) int32
    C, S, L = x.shape

    # Per-pixel softmax over the class axis (axis 0).  With the (C, S, 128)
    # layout, max/sum over C are elementwise VPU ops across C planes.
    mx = jnp.max(x, axis=0, keepdims=True)           # (1, S, 128)
    e = jnp.exp(x - mx)                              # (C, S, 128)
    denom = jnp.sum(e, axis=0, keepdims=True)        # (1, S, 128), >= 1
    # EUP approximate reciprocal + one Newton step (error ~1e-7, well inside
    # the 1e-5 tolerance); replaces C full-width divides with multiplies.
    inv = pl.reciprocal(denom, approx=True)
    inv = inv * (2.0 - denom * inv)
    probs = e * inv                                  # (C, S, 128)

    # One-hot ground truth via iota compare; padded pixels carry class id == C
    # and therefore never match (onehot stays 0 / cmp stays False there).
    class_ids = lax.broadcasted_iota(jnp.int32, (C, S, L), 0)
    cmp = class_ids == m[None]                       # (C, S, 128) bool
    onehot = cmp.astype(jnp.float32)

    if needs_mask:
        # Padded pixels still softmax to 1 per pixel, so they must be
        # explicitly excluded from the probability sums.
        row = lax.broadcasted_iota(jnp.int32, (S, L), 0)
        lane = lax.broadcasted_iota(jnp.int32, (S, L), 1)
        gidx = ((chunk * tiles_per_chunk + t) * S + row) * L + lane
        valid = (gidx < hw).astype(jnp.float32)
        probs = probs * valid[None]

    # Reduce only over the sublane/S axis; keep the 128-lane axis so the
    # accumulator and its store stay lane-dense.  The final lane reduction
    # happens once in the JAX epilogue.
    inter = jnp.sum(jnp.where(cmp, probs, 0.0), axis=1)   # (C, 128)
    psum = jnp.sum(probs, axis=1)                          # (C, 128)
    msum = jnp.sum(onehot, axis=1)                         # (C, 128)

    @pl.when(t == 0)
    def _():
        out_ref[...] = jnp.zeros_like(out_ref)

    out_ref[0, 0, 0] += inter
    out_ref[0, 0, 1] += psum
    out_ref[0, 0, 2] += msum


@functools.partial(jax.jit, static_argnames=("pixel_tile", "num_chunks"))
def dice_loss(logits, masks, pixel_tile=4096, num_chunks=None):
    """logits: (N, C, H, W) float; masks: (N, H, W) int. Returns scalar loss."""
    N, C, H, W = logits.shape
    HW = H * W

    # ---- tiling decisions (all static) -------------------------------------
    s_full = pl.cdiv(HW, _LANE)                      # rows of 128 pixels
    s_des = max(1, pixel_tile // _LANE)
    if s_full <= s_des:
        s_tile = s_full                              # one tile covers the image
    else:
        s_tile = max(8, (s_des // 8) * 8)            # keep sublane dim /8
    n_tiles_total = pl.cdiv(s_full, s_tile)

    # Extra parallel grid axis so both TensorCores (v7x) get work when N is 1.
    if num_chunks is None:
        num_chunks = 1 if N >= 2 else min(2, n_tiles_total)
    num_chunks = max(1, min(num_chunks, n_tiles_total))
    tiles_per_chunk = pl.cdiv(n_tiles_total, num_chunks)
    s_padded = num_chunks * tiles_per_chunk * s_tile
    hw_padded = s_padded * _LANE
    needs_mask = hw_padded != HW
    pad_px = hw_padded - HW

    # ---- input re-layout (reshape is free; pad only when needed) -----------
    logits_flat = logits.reshape(N, C, HW)           # keep incoming dtype
    masks_i32 = masks.astype(jnp.int32).reshape(N, HW)
    if pad_px:
        logits_flat = jnp.pad(logits_flat, ((0, 0), (0, 0), (0, pad_px)))
        masks_i32 = jnp.pad(masks_i32, ((0, 0), (0, pad_px)),
                            constant_values=C)       # out-of-range class
    logits_4d = logits_flat.reshape(N, C, s_padded, _LANE)
    masks_4d = masks_i32.reshape(N, 1, s_padded, _LANE)

    # ---- VMEM budget: raise the scoped limit only when needed --------------
    itemsize = jnp.dtype(logits.dtype).itemsize
    blk_in = C * s_tile * _LANE * itemsize + s_tile * _LANE * 4
    est = 2 * blk_in + 2 * (3 * C * _LANE * 4) + 8 * C * s_tile * _LANE * 4
    vmem_limit = None
    if est > (24 << 20):
        # stay within v7x's 64 MiB physical VMEM; lower pixel_tile for huge C
        vmem_limit = min(est + (8 << 20), 64 << 20)

    kernel = functools.partial(
        _dice_sums_kernel, hw=HW, tiles_per_chunk=tiles_per_chunk,
        needs_mask=needs_mask)

    sums = pl.pallas_call(
        kernel,
        out_shape=jax.ShapeDtypeStruct((N, num_chunks, 3, C, _LANE),
                                       jnp.float32),
        grid_spec=pltpu.PrefetchScalarGridSpec(
            num_scalar_prefetch=0,
            grid=(N, num_chunks, tiles_per_chunk),
            in_specs=[
                pl.BlockSpec((1, C, s_tile, _LANE),
                             lambda n, c, t: (n, 0, c * tiles_per_chunk + t, 0)),
                pl.BlockSpec((1, 1, s_tile, _LANE),
                             lambda n, c, t: (n, 0, c * tiles_per_chunk + t, 0)),
            ],
            out_specs=pl.BlockSpec((1, 1, 3, C, _LANE),
                                   lambda n, c, t: (n, c, 0, 0, 0)),
        ),
        compiler_params=pltpu.CompilerParams(
            dimension_semantics=("parallel", "parallel", "arbitrary"),
            vmem_limit_bytes=vmem_limit),
    )(logits_4d, masks_4d)

    # ---- tiny epilogue in plain JAX -----------------------------------------
    per_class = jnp.sum(sums, axis=(1, 4))           # (N, 3, C)
    intersection = per_class[:, 0, :]
    probs_sum = per_class[:, 1, :]
    mask_sum = per_class[:, 2, :]

    total = probs_sum + mask_sum
    dice_coef = 2.0 * intersection / total           # smooth unused, as in PyTorch forward
    avg_class_dice = jnp.mean(dice_coef, axis=1)     # (N,)
    return 1.0 - jnp.mean(avg_class_dice)


def _dice_loss_ref(logits, masks):
    # pure-JAX reference mirroring the PyTorch forward
    N, C, H, W = logits.shape
    probs = jax.nn.softmax(logits, axis=1)
    onehot = jax.nn.one_hot(masks, C, dtype=jnp.float32)          # (N,H,W,C)
    onehot = jnp.transpose(onehot, (0, 3, 1, 2))                  # (N,C,H,W)
    probs = probs.reshape(N, C, -1)
    onehot = onehot.reshape(N, C, -1)
    intersection = jnp.sum(probs * onehot, axis=2)
    total = probs.sum(axis=2) + onehot.sum(axis=2)
    dice = 2.0 * intersection / total
    return 1.0 - dice.mean(axis=1).mean()


if __name__ == "__main__":
    key = jax.random.PRNGKey(0)
    k1, k2, k3, k4 = jax.random.split(key, 4)

    # Primary check: shapes matching the module spec (no padding path).
    N, C, H, W = 2, 4, 16, 16
    logits = jax.random.normal(k1, (N, C, H, W), dtype=jnp.float32)
    masks = jax.random.randint(k2, (N, H, W), 0, C, dtype=jnp.int32)
    loss = dice_loss(logits, masks)
    jax.block_until_ready(loss)
    ref = _dice_loss_ref(logits, masks)
    assert jnp.allclose(loss, ref, atol=1e-5, rtol=1e-5), (loss, ref)

    # N=1 with a ragged tail and multiple tiles: exercises padding/masking and
    # the chunk axis (dual-TC on v7x) in a single extra compile.
    logits2 = jax.random.normal(k3, (1, 5, 40, 40), dtype=jnp.float32)
    masks2 = jax.random.randint(k4, (1, 40, 40), 0, 5, dtype=jnp.int32)
    loss2 = dice_loss(logits2, masks2, pixel_tile=1024)
    jax.block_until_ready(loss2)
    ref2 = _dice_loss_ref(logits2, masks2)
    assert jnp.allclose(loss2, ref2, atol=1e-5, rtol=1e-5), (loss2, ref2)

    print("KERNEL_OK")
</pallas_src>

<mosaic_0001>
module attributes {stable_mosaic.version = 11 : i64} {
  func.func @_dice_sums_kernel(%arg0: i32, %arg1: i32, %arg2: i32, %arg3: memref<1x4x2x128xf32, #tpu.memory_space<vmem>>, %arg4: memref<1x1x2x128xi32, #tpu.memory_space<vmem>>, %arg5: memref<1x1x3x4x128xf32, #tpu.memory_space<vmem>>) attributes {dimension_semantics = [#tpu.dimension_semantics<parallel>, #tpu.dimension_semantics<parallel>, #tpu.dimension_semantics<arbitrary>], iteration_bounds = array<i64: 2, 1, 1>, scalar_prefetch = 0 : i64, scratch_operands = 0 : i64, tpu.core_type = #tpu.core_type<tc>, window_params = [{transform_indices = @transform_0, window_bounds = array<i64: 1, 4, 2, 128>}, {transform_indices = @transform_1, window_bounds = array<i64: 1, 1, 2, 128>}, {transform_indices = @transform_2, window_bounds = array<i64: 1, 1, 3, 4, 128>}]} {
    %c0 = arith.constant 0 : index
    %c0_0 = arith.constant 0 : index
    %c0_1 = arith.constant 0 : index
    %c0_2 = arith.constant 0 : index
    %0 = vector.load %arg3[%c0, %c0_0, %c0_1, %c0_2] : memref<1x4x2x128xf32, #tpu.memory_space<vmem>>, vector<1x4x2x128xf32>
    %1 = vector.shape_cast %0 : vector<1x4x2x128xf32> to vector<4x2x128xf32>
    %c0_3 = arith.constant 0 : index
    %c0_4 = arith.constant 0 : index
    %c0_5 = arith.constant 0 : index
    %c0_6 = arith.constant 0 : index
    %2 = vector.load %arg4[%c0_3, %c0_4, %c0_5, %c0_6] : memref<1x1x2x128xi32, #tpu.memory_space<vmem>>, vector<1x1x2x128xi32>
    %3 = vector.shape_cast %2 : vector<1x1x2x128xi32> to vector<2x128xi32>
    %cst = arith.constant dense<0xFF800000> : vector<2x128xf32>
    %4 = vector.multi_reduction <maximumf>, %1, %cst [0] : vector<4x2x128xf32> to vector<2x128xf32>
    %5 = vector.shape_cast %4 : vector<2x128xf32> to vector<1x2x128xf32>
    %6 = vector.broadcast %5 : vector<1x2x128xf32> to vector<4x2x128xf32>
    %7 = arith.subf %1, %6 : vector<4x2x128xf32>
    %8 = math.exp %7 : vector<4x2x128xf32>
    %cst_7 = arith.constant dense<0.000000e+00> : vector<2x128xf32>
    %9 = vector.multi_reduction <add>, %8, %cst_7 [0] : vector<4x2x128xf32> to vector<2x128xf32>
    %10 = vector.shape_cast %9 : vector<2x128xf32> to vector<1x2x128xf32>
    %11 = tpu.reciprocal %10 {approx = true} : vector<1x2x128xf32> -> vector<1x2x128xf32>
    %12 = arith.mulf %10, %11 : vector<1x2x128xf32>
    %cst_8 = arith.constant 2.000000e+00 : f32
    %13 = vector.broadcast %cst_8 : f32 to vector<1x2x128xf32>
    %14 = arith.subf %13, %12 : vector<1x2x128xf32>
    %15 = arith.mulf %11, %14 : vector<1x2x128xf32>
    %16 = vector.broadcast %15 : vector<1x2x128xf32> to vector<4x2x128xf32>
    %17 = arith.mulf %8, %16 : vector<4x2x128xf32>
    %18 = tpu.iota {dimensions = array<i32: 0>} : vector<4x2x128xi32>
    %19 = vector.shape_cast %3 : vector<2x128xi32> to vector<1x2x128xi32>
    %20 = vector.broadcast %19 : vector<1x2x128xi32> to vector<4x2x128xi32>
    %21 = arith.cmpi eq, %18, %20 : vector<4x2x128xi32>
    %22 = arith.extui %21 : vector<4x2x128xi1> to vector<4x2x128xi32>
    %23 = arith.sitofp %22 : vector<4x2x128xi32> to vector<4x2x128xf32>
    %cst_9 = arith.constant 0.000000e+00 : f32
    %24 = vector.broadcast %cst_9 : f32 to vector<4x2x128xf32>
    %25 = arith.select %21, %17, %24 : vector<4x2x128xi1>, vector<4x2x128xf32>
    %cst_10 = arith.constant dense<0.000000e+00> : vector<4x128xf32>
    %26 = vector.multi_reduction <add>, %25, %cst_10 [1] : vector<4x2x128xf32> to vector<4x128xf32>
    %cst_11 = arith.constant dense<0.000000e+00> : vector<4x128xf32>
    %27 = vector.multi_reduction <add>, %17, %cst_11 [1] : vector<4x2x128xf32> to vector<4x128xf32>
    %cst_12 = arith.constant dense<0.000000e+00> : vector<4x128xf32>
    %28 = vector.multi_reduction <add>, %23, %cst_12 [1] : vector<4x2x128xf32> to vector<4x128xf32>
    %c0_i32 = arith.constant 0 : i32
    %29 = arith.cmpi eq, %arg2, %c0_i32 : i32
    %30 = arith.extui %29 : i1 to i32
    %c0_i32_13 = arith.constant 0 : i32
    %31 = arith.cmpi ne, %30, %c0_i32_13 : i32
    scf.if %31 {
      %cst_42 = arith.constant 0.000000e+00 : f32
      %50 = vector.broadcast %cst_42 : f32 to vector<1x1x3x4x128xf32>
      %c0_43 = arith.constant 0 : index
      %c0_44 = arith.constant 0 : index
      %c0_45 = arith.constant 0 : index
      %c0_46 = arith.constant 0 : index
      %c0_47 = arith.constant 0 : index
      %51 = vector.load %arg5[%c0_43, %c0_44, %c0_45, %c0_46, %c0_47] : memref<1x1x3x4x128xf32, #tpu.memory_space<vmem>>, vector<1x1x3x4x128xf32>
      tpu.vector_store %arg5[%c0_43, %c0_44, %c0_45, %c0_46, %c0_47], %50 {strides = array<i32>} : memref<1x1x3x4x128xf32, #tpu.memory_space<vmem>>, vector<1x1x3x4x128xf32>,
    } else {
    }
    %c0_14 = arith.constant 0 : index
    %c0_15 = arith.constant 0 : index
    %c0_16 = arith.constant 0 : index
    %c0_17 = arith.constant 0 : index
    %c0_18 = arith.constant 0 : index
    %32 = vector.load %arg5[%c0_14, %c0_15, %c0_16, %c0_17, %c0_18] : memref<1x1x3x4x128xf32, #tpu.memory_space<vmem>>, vector<1x1x1x4x128xf32>
    %33 = vector.shape_cast %32 : vector<1x1x1x4x128xf32> to vector<4x128xf32>
    %34 = arith.addf %33, %26 : vector<4x128xf32>
    %c0_19 = arith.constant 0 : index
    %c0_20 = arith.constant 0 : index
    %c0_21 = arith.constant 0 : index
    %c0_22 = arith.constant 0 : index
    %c0_23 = arith.constant 0 : index
    %35 = vector.load %arg5[%c0_19, %c0_20, %c0_21, %c0_22, %c0_23] : memref<1x1x3x4x128xf32, #tpu.memory_space<vmem>>, vector<1x1x1x4x128xf32>
    %36 = vector.shape_cast %35 : vector<1x1x1x4x128xf32> to vector<4x128xf32>
    %37 = vector.shape_cast %34 : vector<4x128xf32> to vector<1x1x1x4x128xf32>
    tpu.vector_store %arg5[%c0_19, %c0_20, %c0_21, %c0_22, %c0_23], %37 {strides = array<i32>} : memref<1x1x3x4x128xf32, #tpu.memory_space<vmem>>, vector<1x1x1x4x128xf32>,
    %c0_24 = arith.constant 0 : index
    %c0_25 = arith.constant 0 : index
    %c1 = arith.constant 1 : index
    %c0_26 = arith.constant 0 : index
    %c0_27 = arith.constant 0 : index
    %38 = vector.load %arg5[%c0_24, %c0_25, %c1, %c0_26, %c0_27] : memref<1x1x3x4x128xf32, #tpu.memory_space<vmem>>, vector<1x1x1x4x128xf32>
    %39 = vector.shape_cast %38 : vector<1x1x1x4x128xf32> to vector<4x128xf32>
    %40 = arith.addf %39, %27 : vector<4x128xf32>
    %c0_28 = arith.constant 0 : index
    %c0_29 = arith.constant 0 : index
    %c1_30 = arith.constant 1 : index
    %c0_31 = arith.constant 0 : index
    %c0_32 = arith.constant 0 : index
    %41 = vector.load %arg5[%c0_28, %c0_29, %c1_30, %c0_31, %c0_32] : memref<1x1x3x4x128xf32, #tpu.memory_space<vmem>>, vector<1x1x1x4x128xf32>
    %42 = vector.shape_cast %41 : vector<1x1x1x4x128xf32> to vector<4x128xf32>
    %43 = vector.shape_cast %40 : vector<4x128xf32> to vector<1x1x1x4x128xf32>
    tpu.vector_store %arg5[%c0_28, %c0_29, %c1_30, %c0_31, %c0_32], %43 {strides = array<i32>} : memref<1x1x3x4x128xf32, #tpu.memory_space<vmem>>, vector<1x1x1x4x128xf32>,
    %c0_33 = arith.constant 0 : index
    %c0_34 = arith.constant 0 : index
    %c2 = arith.constant 2 : index
    %c0_35 = arith.constant 0 : index
    %c0_36 = arith.constant 0 : index
    %44 = vector.load %arg5[%c0_33, %c0_34, %c2, %c0_35, %c0_36] : memref<1x1x3x4x128xf32, #tpu.memory_space<vmem>>, vector<1x1x1x4x128xf32>
    %45 = vector.shape_cast %44 : vector<1x1x1x4x128xf32> to vector<4x128xf32>
    %46 = arith.addf %45, %28 : vector<4x128xf32>
    %c0_37 = arith.constant 0 : index
    %c0_38 = arith.constant 0 : index
    %c2_39 = arith.constant 2 : index
    %c0_40 = arith.constant 0 : index
    %c0_41 = arith.constant 0 : index
    %47 = vector.load %arg5[%c0_37, %c0_38, %c2_39, %c0_40, %c0_41] : memref<1x1x3x4x128xf32, #tpu.memory_space<vmem>>, vector<1x1x1x4x128xf32>
    %48 = vector.shape_cast %47 : vector<1x1x1x4x128xf32> to vector<4x128xf32>
    %49 = vector.shape_cast %46 : vector<4x128xf32> to vector<1x1x1x4x128xf32>
    tpu.vector_store %arg5[%c0_37, %c0_38, %c2_39, %c0_40, %c0_41], %49 {strides = array<i32>} : memref<1x1x3x4x128xf32, #tpu.memory_space<vmem>>, vector<1x1x1x4x128xf32>,
    return
  }
  func.func @transform_0(%arg0: i32, %arg1: i32, %arg2: i32) -> (i32, i32, i32, i32) {
    %c1_i32 = arith.constant 1 : i32
    %0 = arith.muli %arg1, %c1_i32 : i32
    %1 = arith.addi %0, %arg2 : i32
    %c0_i32 = arith.constant 0 : i32
    %c0_i32_0 = arith.constant 0 : i32
    %c0_i32_1 = arith.constant 0 : i32
    return %arg0, %c0_i32, %1, %c0_i32_0 : i32, i32, i32, i32
  }
  func.func @transform_1(%arg0: i32, %arg1: i32, %arg2: i32) -> (i32, i32, i32, i32) {
    %c1_i32 = arith.constant 1 : i32
    %0 = arith.muli %arg1, %c1_i32 : i32
    %1 = arith.addi %0, %arg2 : i32
    %c0_i32 = arith.constant 0 : i32
    %c0_i32_0 = arith.constant 0 : i32
    %c0_i32_1 = arith.constant 0 : i32
    return %arg0, %c0_i32, %1, %c0_i32_0 : i32, i32, i32, i32
  }
  func.func @transform_2(%arg0: i32, %arg1: i32, %arg2: i32) -> (i32, i32, i32, i32, i32) {
    %c0_i32 = arith.constant 0 : i32
    %c0_i32_0 = arith.constant 0 : i32
    %c0_i32_1 = arith.constant 0 : i32
    %c0_i32_2 = arith.constant 0 : i32
    return %arg0, %arg1, %c0_i32, %c0_i32_0, %c0_i32_1 : i32, i32, i32, i32, i32
  }
}

</mosaic_0001>

<llo_original>
// kernel: dice_loss.1
$region0: #{dice_loss.1}
  #allocation0 [shape = 'u32[]', space=smem, size = 0x4, offset = 0x4, fixed_abs, tag = 'smem constant byte address 0x4 - core index']
  #allocation1 [shape = 'u32[144,128]{1,0:T(1,128)}', space=vmem, size = 0x12000, scoped, tag = 'internal scratch']
  %s0 = inlined_call_operand.vmem [shape: f32[2,4,2,128], index: 0, kind: input, shape index: {}]
  %s1 = inlined_call_operand.vmem [shape: s32[2,1,2,128], index: 1, kind: input, shape index: {}]
  %s2 = inlined_call_operand.vmem [shape: f32[2,1,3,4,128], index: 2, kind: output, shape index: {}]
  %s3 = sld [smem:[#allocation0]]
  $region45: #{dice_loss.1} parent=0
    _
  %s5 = ssub.s32 1, %s3
  %s6 = scalar_select 0, %s5, %s3
  loop: start=0, step=1, limit=4
  $region2: #{dice_loss.1} parent=0 // loop_pre_header
    _
  $region3: #{dice_loss.1} parent=0 // loop_header
    %s8 = sphi 0, %s12
    %p9 = scmp.ge.s32.totalorder %s8, 4
    %s15 = sphi 0, %s34
    %s16 = sphi 0, %s30
    %s17 = sphi 0, %s26
    %s18 = sphi 0, %s15
    %s19 = sphi 0, %s16
    %s20 = sphi 0, %s17
    %s21 = sphi 0, %s18
    %s22 = sphi 0, %s19
    %s23 = sphi 0, %s20
    %s41 = sphi 0, %s43
    %s44 = sphi 0, %s41
    %s45 = sphi 0, %s44
    %s61 = sphi 0, %s45
    %s71 = sphi 0, %s73
    %s74 = sphi 0, %s71
    %s75 = sphi 0, %s74
    %s91 = sphi 0, %s75
    %s99 = sphi 0, %s101
    %s102 = sphi 0, %s99
    %s103 = sphi 0, %s102
    %s119 = sphi 0, %s103
  $region4: #{dice_loss.1} parent=0 // loop_header_branch
    %11 = sbr.rel (%p9) target = $region8
  $region5: #{dice_loss.1} parent=0 // loop_body
    %s13 = ssub.s32 %s8, 1
    %s14 = ssub.s32 %s8, 2
    %s24 = sadd.s32 1, %s17
    %p25 = scmp.ge.s32.totalorder %s24, 1
    %s26 = scalar_select %p25, 0, %s24
    %s27 = sadd.s32 1, %s16
    %s28 = scalar_select %p25, %s27, %s16
    %p29 = scmp.ge.s32.totalorder %s28, 1
    %s30 = scalar_select %p29, 0, %s28
    %s31 = sadd.s32 1, %s15
    %s32 = scalar_select %p29, %s31, %s15
    %p33 = scmp.ge.s32.totalorder %s32, 2
    %s34 = scalar_select %p33, 0, %s32
    %s35 = sadd.s32 %s16, %s17
    %s36 = sadd.s32 %s30, %s26
    %s37 = ssub.s32 %s15, %s34
    %s38 = ssub.s32 %s35, %s36
    %s39 = sor.u32 %s37, %s38
    %p40 = scmp.eq.s32.totalorder %s39, 0
    %s42 = sadd.s32 %s41, 1
    %s43 = scalar_select %p40, %s41, %s42
    %p46 = pneg %p40
    %p47 = scmp.eq.s32.totalorder %s8, 1
    %p48 = por %p46, %p47
    %p49 = scmp.ne.s32.totalorder %s41, %s44
    %p50 = scmp.eq.s32.totalorder %s8, 0
    %p51 = por %p49, %p50
    %p52 = scmp.ne.s32.totalorder %s41, %s44
    %p53 = scmp.eq.s32.totalorder %s13, 1
    %p54 = por %p52, %p53
    %p55 = scmp.ne.s32.totalorder %s44, %s45
    %p56 = scmp.eq.s32.totalorder %s13, 0
    %p57 = por %p55, %p56
    %p58 = scmp.ne.s32.totalorder %s44, %s45
    %p59 = scmp.eq.s32.totalorder %s14, 1
    %p60 = por %p58, %p59
    %p62 = scmp.ne.s32.totalorder %s45, %s61
    %p63 = scmp.eq.s32.totalorder %s14, 0
    %p64 = por %p62, %p63
    %s65 = sadd.s32 %s16, %s17
    %s66 = sadd.s32 %s30, %s26
    %s67 = ssub.s32 %s15, %s34
    %s68 = ssub.s32 %s65, %s66
    %s69 = sor.u32 %s67, %s68
    %p70 = scmp.eq.s32.totalorder %s69, 0
    %s72 = sadd.s32 %s71, 1
    %s73 = scalar_select %p70, %s71, %s72
    %p76 = pneg %p70
    %p77 = scmp.eq.s32.totalorder %s8, 1
    %p78 = por %p76, %p77
    %p79 = scmp.ne.s32.totalorder %s71, %s74
    %p80 = scmp.eq.s32.totalorder %s8, 0
    %p81 = por %p79, %p80
    %p82 = scmp.ne.s32.totalorder %s71, %s74
    %p83 = scmp.eq.s32.totalorder %s13, 1
    %p84 = por %p82, %p83
    %p85 = scmp.ne.s32.totalorder %s74, %s75
    %p86 = scmp.eq.s32.totalorder %s13, 0
    %p87 = por %p85, %p86
    %p88 = scmp.ne.s32.totalorder %s74, %s75
    %p89 = scmp.eq.s32.totalorder %s14, 1
    %p90 = por %p88, %p89
    %p92 = scmp.ne.s32.totalorder %s75, %s91
    %p93 = scmp.eq.s32.totalorder %s14, 0
    %p94 = por %p92, %p93
    %s95 = ssub.s32 %s15, %s34
    %s96 = ssub.s32 %s16, %s30
    %s97 = sor.u32 %s95, %s96
    %p98 = scmp.eq.s32.totalorder %s97, 0
    %s100 = sadd.s32 %s99, 1
    %s101 = scalar_select %p98, %s99, %s100
    %p104 = pneg %p98
    %p105 = scmp.eq.s32.totalorder %s8, 1
    %p106 = por %p104, %p105
    %p107 = scmp.ne.s32.totalorder %s99, %s102
    %p108 = scmp.eq.s32.totalorder %s8, 0
    %p109 = por %p107, %p108
    %p110 = scmp.ne.s32.totalorder %s99, %s102
    %p111 = scmp.eq.s32.totalorder %s13, 1
    %p112 = por %p110, %p111
    %p113 = scmp.ne.s32.totalorder %s102, %s103
    %p114 = scmp.eq.s32.totalorder %s13, 0
    %p115 = por %p113, %p114
    %p116 = scmp.ne.s32.totalorder %s102, %s103
    %p117 = scmp.eq.s32.totalorder %s14, 1
    %p118 = por %p116, %p117
    %p120 = scmp.ne.s32.totalorder %s103, %s119
    %p121 = scmp.eq.s32.totalorder %s14, 0
    %p122 = por %p120, %p121
    %p123 = scmp.le.s32.totalorder 1, %s8
    %p124 = scmp.lt.s32.totalorder %s8, 3
    %p125 = pnand %p123, %p124
    %p126 = pneg %p125
    // Predicated region
    $region9: #{dice_loss.1} parent=5 // pred_check
      _
    $region10: #{dice_loss.1} parent=5 // pred_check_branch
      %128 = sbr.rel (%p125) target = $region12
    $region11: #{dice_loss.1} parent=5 // pred_region
      %s129 = ssub.s32 %s8, 1
    $region12: #{dice_loss.1} parent=5 // pred_fallthru
      _
    %p130 = scmp.lt.s32.totalorder %s8, 2
    // Predicated region
    $region13: #{dice_loss.1} parent=5 // pred_check
      %p131 = pneg %p130
    $region14: #{dice_loss.1} parent=5 // pred_check_branch
      %133 = sbr.rel (%p131) target = $region16
    $region15: #{dice_loss.1} parent=5 // pred_region
      // Predicated region
      $region17: #{dice_loss.1} parent=15 // pred_check
        %p134 = pneg %p51
      $region18: #{dice_loss.1} parent=15 // pred_check_branch
        %136 = sbr.rel (%p134) target = $region20
      $region19: #{dice_loss.1} parent=15 // pred_region
        %s137 = sadd.s32 %s16, %s17
        %p138 = scmp.lt.s32.totalorder %s15, 1
        %s139 = scalar_select %p138, %s15, 1
        %p140 = scmp.lt.s32.totalorder %s137, 0
        %s141 = scalar_select %p140, %s137, 0
        %s142 = smul.addr %s139, 4
        %s143 = sadd.s32 %s141, %s142
        %s144 = smul.addr %s143, 2
        %s145 = scalar_lea.vmem %s0, %s144
        %s146 = sadd.s32 %s16, %s17
      $region20: #{dice_loss.1} parent=15 // pred_fallthru
        _
      // Predicated region
      $region21: #{dice_loss.1} parent=15 // pred_check
        %p147 = pneg %p81
      $region22: #{dice_loss.1} parent=15 // pred_check_branch
        %149 = sbr.rel (%p147) target = $region24
      $region23: #{dice_loss.1} parent=15 // pred_region
        %s150 = sadd.s32 %s16, %s17
        %p151 = scmp.lt.s32.totalorder %s15, 1
        %s152 = scalar_select %p151, %s15, 1
        %p153 = scmp.lt.s32.totalorder %s150, 0
        %s154 = scalar_select %p153, %s150, 0
        %s155 = sadd.s32 %s154, %s152
        %s156 = smul.addr %s155, 2
        %s157 = scalar_lea.vmem %s1, %s156
        %s158 = sadd.s32 %s16, %s17
      $region24: #{dice_loss.1} parent=15 // pred_fallthru
        _
    $region16: #{dice_loss.1} parent=5 // pred_fallthru
      _
    %p159 = scmp.le.s32.totalorder 1, %s8
    %p160 = scmp.lt.s32.totalorder %s8, 3
    %p161 = pnand %p159, %p160
    %p162 = pneg %p161
    // Predicated region
    $region25: #{dice_loss.1} parent=5 // pred_check
      _
    $region26: #{dice_loss.1} parent=5 // pred_check_branch
      %164 = sbr.rel (%p161) target = $region28
    $region27: #{dice_loss.1} parent=5 // pred_region
      %s165 = ssub.s32 %s8, 1
      %s166 = sadd.s32 %s19, %s20
      %p167 = scmp.lt.s32.totalorder %s18, 1
      %s168 = scalar_select %p167, %s18, 1
      %p169 = scmp.lt.s32.totalorder %s166, 0
      %s170 = scalar_select %p169, %s166, 0
      %s171 = smul.addr %s168, 4
      %s172 = sadd.s32 %s170, %s171
      %s173 = smul.addr %s172, 2
      %s174 = scalar_lea.vmem %s0, %s173
      %p175 = pneg %p57
      %p176 = pneg %p54
      %s177 = sadd.s32 %s19, %s20
      %p178 = scmp.lt.s32.totalorder %s18, 1
      %s179 = scalar_select %p178, %s18, 1
      %p180 = scmp.lt.s32.totalorder %s177, 0
      %s181 = scalar_select %p180, %s177, 0
      %s182 = sadd.s32 %s181, %s179
      %s183 = smul.addr %s182, 2
      %s184 = scalar_lea.vmem %s1, %s183
      %p185 = pneg %p87
      %p186 = pneg %p84
      %p187 = pneg %p115
      %p188 = pneg %p112
      %p189 = scmp.lt.s32.totalorder %s18, 1
      %s190 = scalar_select %p189, %s18, 1
      %p191 = scmp.lt.s32.totalorder %s19, 0
      %s192 = scalar_select %p191, %s19, 0
      %s193 = smul.addr %s192, 3
      %s194 = smul.addr %s190, 3
      %s195 = sadd.s32 %s193, %s194
      %s196 = smul.addr %s195, 4
      %s197 = scalar_lea.vmem %s2, %s196
      %s198 = sadd.s32 %s19, %s20
      %p199 = scmp.lt.s32.totalorder %s18, 1
      %s200 = scalar_select %p199, %s18, 1
      %p201 = scmp.lt.s32.totalorder %s198, 0
      %s202 = scalar_select %p201, %s198, 0
      %s203 = smul.addr %s200, 4
      %s204 = sadd.s32 %s202, %s203
      %s205 = smul.addr %s204, 2
      %s206 = scalar_lea.vmem %s0, %s205
      %s207 = sadd.s32 %s19, %s20
      %s208 = sadd.s32 %s19, %s20
      %p209 = scmp.lt.s32.totalorder %s18, 1
      %s210 = scalar_select %p209, %s18, 1
      %p211 = scmp.lt.s32.totalorder %s208, 0
      %s212 = scalar_select %p211, %s208, 0
      %s213 = sadd.s32 %s212, %s210
      %s214 = smul.addr %s213, 2
      %s215 = scalar_lea.vmem %s1, %s214
      %s216 = sadd.s32 %s19, %s20
      %p217 = scmp.lt.s32.totalorder %s18, 1
      %s218 = scalar_select %p217, %s18, 1
      %p219 = scmp.lt.s32.totalorder %s19, 0
      %s220 = scalar_select %p219, %s19, 0
      %s221 = smul.addr %s220, 3
      %s222 = smul.addr %s218, 3
      %s223 = sadd.s32 %s221, %s222
      %s224 = smul.addr %s223, 4
      %s225 = scalar_lea.vmem %s2, %s224
      %v226 = vld [vmem:[%s206] sm:$0x3]
      %v227 = vld [vmem:[%s206 + $0x2] sm:$0x3]
      %v228 = vld [vmem:[%s206 + $0x4] sm:$0x3]
      %v229 = vld [vmem:[%s206 + $0x6] sm:$0x3]
      %v230 = vld [vmem:[%s215] sm:$0x3]
      %vm231 = vcmask 1041408
      %v232 = vsel %vm231, %v226, -inf
      %v233 = vsel %vm231, %v227, -inf
      %v234 = vsel %vm231, %v228, -inf
      %v235 = vsel %vm231, %v229, -inf
      %v236 = vmax.f32 %v232, %v233
      %v237 = vmax.f32 %v234, %v235
      %v238 = vmax.f32 %v236, %v237
      %v239 = vsub.f32 %v226, %v238
      %v240 = vsub.f32 %v227, %v238
      %v241 = vsub.f32 %v228, %v238
      %v242 = vsub.f32 %v229, %v238
      %v243 = vmul.f32 %v239, 1.442695
      %v244 = vpow.pop %v243
      %v245 = vmul.f32 %v240, 1.442695
      %v246 = vpow.pop %v245
      %v247 = vmul.f32 %v241, 1.442695
      %v248 = vpow.pop %v247
      %v249 = vmul.f32 %v242, 1.442695
      %v250 = vpow.pop %v249
      %v251 = vsel %vm231, %v244, 0.0
      %v252 = vsel %vm231, %v246, 0.0
      %v253 = vadd.f32 %v251, %v252
      %v254 = vsel %vm231, %v248, 0.0
      %v255 = vadd.f32 %v253, %v254
      %v256 = vsel %vm231, %v250, 0.0
      %v257 = vadd.f32 %v255, %v256
      %v258 = vrcp.pop %v257
      %v259 = vmul.f32 %v257, %v258
      %v260 = vsub.f32 2.0, %v259
      %v261 = vmul.f32 %v258, %v260
      %v262 = vmul.f32 %v244, %v261
      %v263 = vmul.f32 %v246, %v261
      %v264 = vmul.f32 %v248, %v261
      %v265 = vmul.f32 %v250, %v261
      %vm266 = vcmp.eq.s32.totalorder %v230, 0
      %vm267 = vcmp.eq.s32.totalorder %v230, 1
      %vm268 = vcmp.eq.s32.totalorder %v230, 2
      %vm269 = vcmp.eq.s32.totalorder %v230, 3
      %v270 = vsel %vm266, 1, 0
      %v271 = vsel %vm267, 1, 0
      %v272 = vsel %vm268, 1, 0
      %v273 = vsel %vm269, 1, 0
      %v274 = vcvt.s32.f32 %v270
      %v275 = vcvt.s32.f32 %v271
      %v276 = vcvt.s32.f32 %v272
      %v277 = vcvt.s32.f32 %v273
      %v278 = vsel %vm266, %v262, 0.0
      %v279 = vsel %vm267, %v263, 0.0
      %v280 = vsel %vm268, %v264, 0.0
      %v281 = vsel %vm269, %v265, 0.0
      %v282 = vsel %vm231, %v278, 0.0
      %v283 = vrot.slane %v282, 4
      %v284 = vadd.f32 %v282, %v283
      %v285 = vrot.slane %v284, 2
      %v286 = vadd.f32 %v284, %v285
      %v287 = vrot.slane %v286, 1
      %v288 = vadd.f32 %v286, %v287
      %v289 = vsel %vm231, %v279, 0.0
      %v290 = vrot.slane %v289, 4
      %v291 = vadd.f32 %v289, %v290
      %v292 = vrot.slane %v291, 2
      %v293 = vadd.f32 %v291, %v292
      %v294 = vrot.slane %v293, 1
      %v295 = vadd.f32 %v293, %v294
      %v296 = vsel %vm231, %v280, 0.0
      %v297 = vrot.slane %v296, 4
      %v298 = vadd.f32 %v296, %v297
      %v299 = vrot.slane %v298, 2
      %v300 = vadd.f32 %v298, %v299
      %v301 = vrot.slane %v300, 1
      %v302 = vadd.f32 %v300, %v301
      %v303 = vsel %vm231, %v281, 0.0
      %v304 = vrot.slane %v303, 4
      %v305 = vadd.f32 %v303, %v304
      %v306 = vrot.slane %v305, 2
      %v307 = vadd.f32 %v305, %v306
      %v308 = vrot.slane %v307, 1
      %v309 = vadd.f32 %v307, %v308
      %v310 = vsel %vm231, %v262, 0.0
      %v311 = vrot.slane %v310, 4
      %v312 = vadd.f32 %v310, %v311
      %v313 = vrot.slane %v312, 2
      %v314 = vadd.f32 %v312, %v313
      %v315 = vrot.slane %v314, 1
      %v316 = vadd.f32 %v314, %v315
      %v317 = vsel %vm231, %v263, 0.0
      %v318 = vrot.slane %v317, 4
      %v319 = vadd.f32 %v317, %v318
      %v320 = vrot.slane %v319, 2
      %v321 = vadd.f32 %v319, %v320
      %v322 = vrot.slane %v321, 1
      %v323 = vadd.f32 %v321, %v322
      %v324 = vsel %vm231, %v264, 0.0
      %v325 = vrot.slane %v324, 4
      %v326 = vadd.f32 %v324, %v325
      %v327 = vrot.slane %v326, 2
      %v328 = vadd.f32 %v326, %v327
      %v329 = vrot.slane %v328, 1
      %v330 = vadd.f32 %v328, %v329
      %v331 = vsel %vm231, %v265, 0.0
      %v332 = vrot.slane %v331, 4
      %v333 = vadd.f32 %v331, %v332
      %v334 = vrot.slane %v333, 2
      %v335 = vadd.f32 %v333, %v334
      %v336 = vrot.slane %v335, 1
      %v337 = vadd.f32 %v335, %v336
      %v338 = vsel %vm231, %v274, 0.0
      %v339 = vrot.slane %v338, 4
      %v340 = vadd.f32 %v338, %v339
      %v341 = vrot.slane %v340, 2
      %v342 = vadd.f32 %v340, %v341
      %v343 = vrot.slane %v342, 1
      %v344 = vadd.f32 %v342, %v343
      %v345 = vsel %vm231, %v275, 0.0
      %v346 = vrot.slane %v345, 4
      %v347 = vadd.f32 %v345, %v346
      %v348 = vrot.slane %v347, 2
      %v349 = vadd.f32 %v347, %v348
      %v350 = vrot.slane %v349, 1
      %v351 = vadd.f32 %v349, %v350
      %v352 = vsel %vm231, %v276, 0.0
      %v353 = vrot.slane %v352, 4
      %v354 = vadd.f32 %v352, %v353
      %v355 = vrot.slane %v354, 2
      %v356 = vadd.f32 %v354, %v355
      %v357 = vrot.slane %v356, 1
      %v358 = vadd.f32 %v356, %v357
      %v359 = vsel %vm231, %v277, 0.0
      %v360 = vrot.slane %v359, 4
      %v361 = vadd.f32 %v359, %v360
      %v362 = vrot.slane %v361, 2
      %v363 = vadd.f32 %v361, %v362
      %v364 = vrot.slane %v363, 1
      %v365 = vadd.f32 %v363, %v364
      %p366 = scmp.eq.s32.totalorder %s20, 0
      // Predicated region
      $region29: #{dice_loss.1} parent=27 // pred_check
        %p367 = pneg %p366
      $region30: #{dice_loss.1} parent=27 // pred_check_branch
        %369 = sbr.rel (%p367) target = $region32
      $region31: #{dice_loss.1} parent=27 // pred_region
        %370 = vst [vmem:[%s225] sm:$0xf] 0.0
        %371 = vst [vmem:[%s225 + $0x4] sm:$0xf] 0.0
        %372 = vst [vmem:[%s225 + $0x8] sm:$0xf] 0.0
      $region32: #{dice_loss.1} parent=27 // pred_fallthru
        _
      %v373 = vld [vmem:[%s225] sm:$0xf]
      %vm378 = vcmask 1041409
      %v379 = vsel %vm378, %v295, %v288
      %vm380 = vcmask 1042434
      %v381 = vsel %vm380, %v302, %v379
      %vm382 = vcmask 1043459
      %v383 = vsel %vm382, %v309, %v381
      %v385 = vadd.f32 %v373, %v383
      %386 = vst [vmem:[%s225] sm:$0xf] %v385
      %s387 = scalar_lea.vmem %s225, 4
      %v388 = vld [vmem:[%s387] sm:$0xf]
      %v393 = vsel %vm378, %v323, %v316
      %v394 = vsel %vm380, %v330, %v393
      %v395 = vsel %vm382, %v337, %v394
      %v397 = vadd.f32 %v388, %v395
      %398 = vst [vmem:[%s387] sm:$0xf] %v397
      %s399 = scalar_lea.vmem %s225, 8
      %v400 = vld [vmem:[%s399] sm:$0xf]
      %v405 = vsel %vm378, %v351, %v344
      %v406 = vsel %vm380, %v358, %v405
      %v407 = vsel %vm382, %v365, %v406
      %v409 = vadd.f32 %v400, %v407
      %410 = vst [vmem:[%s399] sm:$0xf] %v409
      %p411 = scmp.lt.s32.totalorder %s18, 1
      %s412 = scalar_select %p411, %s18, 1
      %p413 = scmp.lt.s32.totalorder %s19, 0
      %s414 = scalar_select %p413, %s19, 0
      %s415 = smul.addr %s414, 3
      %s416 = smul.addr %s412, 3
      %s417 = sadd.s32 %s415, %s416
      %s418 = smul.addr %s417, 4
      %s419 = scalar_lea.vmem %s2, %s418
      // Predicated region
      $region33: #{dice_loss.1} parent=27 // pred_check
        %p420 = pneg %p112
      $region34: #{dice_loss.1} parent=27 // pred_check_branch
        %422 = sbr.rel (%p420) target = $region36
      $region35: #{dice_loss.1} parent=27 // pred_region
        _
      $region36: #{dice_loss.1} parent=27 // pred_fallthru
        _
    $region28: #{dice_loss.1} parent=5 // pred_fallthru
      _
    %p423 = scmp.le.s32.totalorder 2, %s8
    // Predicated region
    $region37: #{dice_loss.1} parent=5 // pred_check
      %p424 = pneg %p423
    $region38: #{dice_loss.1} parent=5 // pred_check_branch
      %426 = sbr.rel (%p424) target = $region40
    $region39: #{dice_loss.1} parent=5 // pred_region
      %s427 = ssub.s32 %s8, 2
      // Predicated region
      $region41: #{dice_loss.1} parent=39 // pred_check
        %p428 = pneg %p118
      $region42: #{dice_loss.1} parent=39 // pred_check_branch
        %430 = sbr.rel (%p428) target = $region44
      $region43: #{dice_loss.1} parent=39 // pred_region
        %p431 = scmp.lt.s32.totalorder %s21, 1
        %s432 = scalar_select %p431, %s21, 1
        %p433 = scmp.lt.s32.totalorder %s22, 0
        %s434 = scalar_select %p433, %s22, 0
        %s435 = smul.addr %s434, 3
        %s436 = smul.addr %s432, 3
        %s437 = sadd.s32 %s435, %s436
        %s438 = smul.addr %s437, 4
        %s439 = scalar_lea.vmem %s2, %s438
      $region44: #{dice_loss.1} parent=39 // pred_fallthru
        _
    $region40: #{dice_loss.1} parent=5 // pred_fallthru
      _
  $region6: #{dice_loss.1} parent=0 // loop_footer
    %s12 = sadd.s32 1, %s8
  $region7: #{dice_loss.1} parent=0 // loop_footer_branch
    %7 = sbr.rel target = $region3
  $region8: #{dice_loss.1} parent=0 // loop_exit
    _

</llo_original>
